<compile_context>
chip_gen: v7x
topology: tpu7x:2x2x1
jax: 0.10.0
libtpu: 0.0.40
codegen_flags: <defaults>
</compile_context>

<pallas_src>
import functools

import jax
import jax.numpy as jnp
from jax import lax
from jax.experimental import pallas as pl
from jax.experimental.pallas import tpu as pltpu


def _distill_kernel(x_ref, wt_ref, bt_ref, logit_ref, lbl_ref, loss_ref,
                    teacher_acc, *, alpha, tau, batch_total, num_classes):
    k = pl.program_id(1)
    k_last = pl.num_programs(1) - 1

    # ---- teacher forward: tiled contraction over D, f32 accumulator ----
    @pl.when(k == 0)
    def _():
        teacher_acc[...] = jnp.zeros_like(teacher_acc)

    teacher_acc[...] += jnp.dot(x_ref[...], wt_ref[...],
                                preferred_element_type=jnp.float32)

    # ---- epilogue: CE + soft-distillation KL on the finished teacher logits ----
    @pl.when(k == k_last)
    def _():
        teacher = teacher_acc[...] + bt_ref[...]          # bias added exactly once
        logits = logit_ref[...].astype(jnp.float32)       # (tile_b, N) student logits
        tb, n = logits.shape
        inv_tau = 1.0 / tau

        # Shared row-max: reused by the CE logsumexp and the tau-scaled
        # student log-softmax (one fewer XLU row-max pass).
        m = jnp.max(logits, axis=-1, keepdims=True)
        lse = m + jnp.log(jnp.sum(jnp.exp(logits - m), axis=-1, keepdims=True))

        # base criterion: cross-entropy partial sum over this batch tile
        onehot = lax.broadcasted_iota(jnp.int32, (tb, n), 1) == lbl_ref[...]
        picked = jnp.sum(jnp.where(onehot, logits, 0.0), axis=-1, keepdims=True)
        base_sum = jnp.sum(lse - picked)

        # student log-softmax at temperature tau (reuses m)
        zs = logits * inv_tau
        ms = m * inv_tau
        lse_s = ms + jnp.log(jnp.sum(jnp.exp(zs - ms), axis=-1, keepdims=True))
        lps = zs - lse_s

        # teacher log-softmax at temperature tau
        zt = teacher * inv_tau
        mt = jnp.max(zt, axis=-1, keepdims=True)
        lse_t = mt + jnp.log(jnp.sum(jnp.exp(zt - mt), axis=-1, keepdims=True))
        lpt = zt - lse_t

        # kl_div(lps, lpt, reduction='sum', log_target=True) partial sum
        kl_sum = jnp.sum(jnp.exp(lpt) * (lpt - lps))

        tile_loss = ((base_sum / batch_total) * (1.0 - alpha)
                     + (kl_sum * (tau * tau) / (batch_total * num_classes)) * alpha)
        loss_ref[...] = jnp.full(loss_ref.shape, tile_loss, dtype=jnp.float32)


def _pick_tile(total, preferred, align):
    """Largest multiple of `align` dividing `total`, capped at `preferred` (else full)."""
    if total <= preferred:
        return total
    t = (preferred // align) * align
    while t >= align:
        if total % t == 0:
            return t
        t -= align
    return total


def distillation_loss(inputs, outputs, labels, teacher_w, teacher_b, *,
                      alpha, tau, tile_b=128, tile_k=2048):
    """inputs: (B,C,H,W) f32, outputs: (B,N) f32 student logits, labels: (B,) int."""
    B, N = outputs.shape
    x_flat = inputs.reshape(B, -1)
    D = x_flat.shape[1]

    # bf16 on the MXU with f32 accumulation; teacher_w streaming dominates HBM
    # traffic so halving its bytes ~doubles throughput when memory-bound.
    x_bf16 = x_flat.astype(jnp.bfloat16)
    w_bf16 = teacher_w.astype(jnp.bfloat16)

    tile_b = _pick_tile(B, tile_b, 16)      # bf16 sublane-friendly batch tile
    tile_k = _pick_tile(D, tile_k, 128)
    n_btiles = B // tile_b
    grid = (n_btiles, D // tile_k)

    kernel = functools.partial(_distill_kernel, alpha=float(alpha), tau=float(tau),
                               batch_total=B, num_classes=N)

    bytes_accessed = (x_bf16.size * 2 + w_bf16.size * 2 + N * 4
                      + outputs.size * 4 + B * 4 + n_btiles * 8 * 128 * 4)
    cost = pl.CostEstimate(flops=2 * B * D * N,
                           transcendentals=3 * B * N,
                           bytes_accessed=bytes_accessed)

    partial = pl.pallas_call(
        kernel,
        out_shape=jax.ShapeDtypeStruct((n_btiles, 8, 128), jnp.float32),
        grid_spec=pltpu.PrefetchScalarGridSpec(
            num_scalar_prefetch=0,
            grid=grid,
            in_specs=[
                pl.BlockSpec((tile_b, tile_k), lambda i, k: (i, k)),   # x tile (bf16)
                pl.BlockSpec((tile_k, N), lambda i, k: (k, 0)),        # W tile (bf16)
                pl.BlockSpec((1, N), lambda i, k: (0, 0)),             # teacher bias
                pl.BlockSpec((tile_b, N), lambda i, k: (i, 0)),        # student logits
                pl.BlockSpec((tile_b, 1), lambda i, k: (i, 0)),        # labels
            ],
            out_specs=pl.BlockSpec((1, 8, 128), lambda i, k: (i, 0, 0)),
            scratch_shapes=[pltpu.VMEM((tile_b, N), jnp.float32)],     # teacher acc
        ),
        compiler_params=pltpu.CompilerParams(
            dimension_semantics=("parallel", "arbitrary"),
            vmem_limit_bytes=48 * 1024 * 1024),
        cost_estimate=cost,
    )(
        x_bf16,
        w_bf16,
        teacher_b.reshape(1, -1).astype(jnp.float32),
        outputs.astype(jnp.float32),
        labels.reshape(B, 1).astype(jnp.int32),
    )
    # Tiny cross-tile reduction of the per-B-tile partial losses.
    return jnp.sum(partial[:, 0, 0])


def _reference(inputs, outputs, labels, teacher_w, teacher_b, *, alpha, tau):
    B, N = outputs.shape
    x_flat = inputs.reshape(B, -1)
    teacher = x_flat @ teacher_w + teacher_b
    lse = jax.scipy.special.logsumexp(outputs, axis=-1)
    base = jnp.mean(lse - outputs[jnp.arange(B), labels])
    lps = jax.nn.log_softmax(outputs / tau, axis=-1)
    lpt = jax.nn.log_softmax(teacher / tau, axis=-1)
    dist = jnp.sum(jnp.exp(lpt) * (lpt - lps)) * (tau * tau) / (B * N)
    return base * (1.0 - alpha) + dist * alpha


if __name__ == "__main__":
    # Small, TPU-tile-friendly shapes: batch=32, channels=4, spatial=16 -> D=1024,
    # classes=128. tile_b=16 / tile_k=256 exercise both grid axes (2 x 4 grid).
    B, C, H, W = 32, 4, 16, 16
    D = C * H * W
    NUM_CLASSES = 128
    ALPHA, TAU = 0.5, 3.0

    key = jax.random.PRNGKey(0)
    k_x, k_out, k_lbl, k_w, k_b = jax.random.split(key, 5)
    inputs = jax.random.normal(k_x, (B, C, H, W), dtype=jnp.float32)      # NCHW
    outputs = jax.random.normal(k_out, (B, NUM_CLASSES), dtype=jnp.float32)
    labels = jax.random.randint(k_lbl, (B,), 0, NUM_CLASSES, dtype=jnp.int32)
    # Deterministic synthetic teacher (linear classifier on flattened pixels).
    teacher_w = 0.02 * jax.random.normal(k_w, (D, NUM_CLASSES), dtype=jnp.float32)
    teacher_b = 0.01 * jax.random.normal(k_b, (NUM_CLASSES,), dtype=jnp.float32)

    loss = distillation_loss(inputs, outputs, labels, teacher_w, teacher_b,
                             alpha=ALPHA, tau=TAU, tile_b=16, tile_k=256)
    loss = jax.block_until_ready(loss)

    ref = _reference(inputs, outputs, labels, teacher_w, teacher_b,
                     alpha=ALPHA, tau=TAU)
    # Slightly looser tolerance than pure-f32: teacher matmul runs bf16 inputs
    # with f32 accumulation on the MXU.
    assert jnp.allclose(loss, ref, rtol=2e-3, atol=2e-3), (loss, ref)
    print("KERNEL_OK")
</pallas_src>

<mosaic_0001>
module attributes {stable_mosaic.version = 11 : i64} {
  func.func @_distill_kernel(%arg0: i32, %arg1: i32, %arg2: memref<16x256xbf16, #tpu.memory_space<vmem>>, %arg3: memref<256x128xbf16, #tpu.memory_space<vmem>>, %arg4: memref<1x128xf32, #tpu.memory_space<vmem>>, %arg5: memref<16x128xf32, #tpu.memory_space<vmem>>, %arg6: memref<16x1xi32, #tpu.memory_space<vmem>>, %arg7: memref<1x8x128xf32, #tpu.memory_space<vmem>>, %arg8: memref<16x128xf32, #tpu.memory_space<vmem>>) attributes {dimension_semantics = [#tpu.dimension_semantics<parallel>, #tpu.dimension_semantics<arbitrary>], iteration_bounds = array<i64: 2, 4>, scalar_prefetch = 0 : i64, scratch_operands = 1 : i64, tpu.core_type = #tpu.core_type<tc>, window_params = [{transform_indices = @transform_0, window_bounds = array<i64: 16, 256>}, {transform_indices = @transform_1, window_bounds = array<i64: 256, 128>}, {pipeline_mode = #tpu.pipeline_mode<synchronous>, transform_indices = @transform_2, window_bounds = array<i64: 1, 128>}, {transform_indices = @transform_3, window_bounds = array<i64: 16, 128>}, {transform_indices = @transform_4, window_bounds = array<i64: 16, 1>}, {transform_indices = @transform_5, window_bounds = array<i64: 1, 8, 128>}]} {
    %c0_i32 = arith.constant 0 : i32
    %0 = arith.cmpi eq, %arg1, %c0_i32 : i32
    %1 = arith.extui %0 : i1 to i32
    %c0_i32_0 = arith.constant 0 : i32
    %2 = arith.cmpi ne, %1, %c0_i32_0 : i32
    scf.if %2 {
      %cst_9 = arith.constant 0.000000e+00 : f32
      %12 = vector.broadcast %cst_9 : f32 to vector<16x128xf32>
      %c0_10 = arith.constant 0 : index
      %c0_11 = arith.constant 0 : index
      %13 = vector.load %arg8[%c0_10, %c0_11] : memref<16x128xf32, #tpu.memory_space<vmem>>, vector<16x128xf32>
      tpu.vector_store %arg8[%c0_10, %c0_11], %12 {strides = array<i32>} : memref<16x128xf32, #tpu.memory_space<vmem>>, vector<16x128xf32>,
    } else {
    }
    %c0 = arith.constant 0 : index
    %c0_1 = arith.constant 0 : index
    %3 = vector.load %arg8[%c0, %c0_1] : memref<16x128xf32, #tpu.memory_space<vmem>>, vector<16x128xf32>
    %c0_2 = arith.constant 0 : index
    %c0_3 = arith.constant 0 : index
    %4 = vector.load %arg2[%c0_2, %c0_3] : memref<16x256xbf16, #tpu.memory_space<vmem>>, vector<16x256xbf16>
    %c0_4 = arith.constant 0 : index
    %c0_5 = arith.constant 0 : index
    %5 = vector.load %arg3[%c0_4, %c0_5] : memref<256x128xbf16, #tpu.memory_space<vmem>>, vector<256x128xbf16>
    %cst = arith.constant dense<0.000000e+00> : vector<16x128xf32>
    %6 = tpu.matmul %4, %5, %cst {dimension_numbers = #tpu.dot_dimension_numbers<[1], [0], [0], [1], [0, 0, 1, 1], [], []>} : vector<16x256xbf16>, vector<256x128xbf16>, vector<16x128xf32> -> vector<16x128xf32>
    %7 = arith.addf %3, %6 : vector<16x128xf32>
    %c0_6 = arith.constant 0 : index
    %c0_7 = arith.constant 0 : index
    %8 = vector.load %arg8[%c0_6, %c0_7] : memref<16x128xf32, #tpu.memory_space<vmem>>, vector<16x128xf32>
    tpu.vector_store %arg8[%c0_6, %c0_7], %7 {strides = array<i32>} : memref<16x128xf32, #tpu.memory_space<vmem>>, vector<16x128xf32>,
    %c3_i32 = arith.constant 3 : i32
    %9 = arith.cmpi eq, %arg1, %c3_i32 : i32
    %10 = arith.extui %9 : i1 to i32
    %c0_i32_8 = arith.constant 0 : i32
    %11 = arith.cmpi ne, %10, %c0_i32_8 : i32
    scf.if %11 {
      %c0_9 = arith.constant 0 : index
      %c0_10 = arith.constant 0 : index
      %12 = vector.load %arg8[%c0_9, %c0_10] : memref<16x128xf32, #tpu.memory_space<vmem>>, vector<16x128xf32>
      %c0_11 = arith.constant 0 : index
      %c0_12 = arith.constant 0 : index
      %13 = vector.load %arg4[%c0_11, %c0_12] : memref<1x128xf32, #tpu.memory_space<vmem>>, vector<1x128xf32>
      %14 = vector.broadcast %13 : vector<1x128xf32> to vector<16x128xf32>
      %15 = arith.addf %12, %14 : vector<16x128xf32>
      %c0_13 = arith.constant 0 : index
      %c0_14 = arith.constant 0 : index
      %16 = vector.load %arg5[%c0_13, %c0_14] : memref<16x128xf32, #tpu.memory_space<vmem>>, vector<16x128xf32>
      %cst_15 = arith.constant dense<0xFF800000> : vector<16xf32>
      %17 = vector.multi_reduction <maximumf>, %16, %cst_15 [1] : vector<16x128xf32> to vector<16xf32>
      %18 = vector.shape_cast %17 : vector<16xf32> to vector<16x1xf32>
      %19 = vector.broadcast %18 : vector<16x1xf32> to vector<16x128xf32>
      %20 = arith.subf %16, %19 : vector<16x128xf32>
      %21 = math.exp %20 : vector<16x128xf32>
      %cst_16 = arith.constant dense<0.000000e+00> : vector<16xf32>
      %22 = vector.multi_reduction <add>, %21, %cst_16 [1] : vector<16x128xf32> to vector<16xf32>
      %23 = vector.shape_cast %22 : vector<16xf32> to vector<16x1xf32>
      %24 = math.log %23 : vector<16x1xf32>
      %25 = arith.addf %18, %24 : vector<16x1xf32>
      %26 = tpu.iota {dimensions = array<i32: 1>} : vector<16x128xi32>
      %c0_17 = arith.constant 0 : index
      %c0_18 = arith.constant 0 : index
      %27 = vector.load %arg6[%c0_17, %c0_18] : memref<16x1xi32, #tpu.memory_space<vmem>>, vector<16x1xi32>
      %28 = vector.broadcast %27 : vector<16x1xi32> to vector<16x128xi32>
      %29 = arith.cmpi eq, %26, %28 : vector<16x128xi32>
      %cst_19 = arith.constant 0.000000e+00 : f32
      %30 = vector.broadcast %cst_19 : f32 to vector<16x128xf32>
      %31 = arith.select %29, %16, %30 : vector<16x128xi1>, vector<16x128xf32>
      %cst_20 = arith.constant dense<0.000000e+00> : vector<16xf32>
      %32 = vector.multi_reduction <add>, %31, %cst_20 [1] : vector<16x128xf32> to vector<16xf32>
      %33 = vector.shape_cast %32 : vector<16xf32> to vector<16x1xf32>
      %34 = arith.subf %25, %33 : vector<16x1xf32>
      %35 = vector.shape_cast %34 : vector<16x1xf32> to vector<1x16x1xf32>
      %cst_21 = arith.constant dense<0.000000e+00> : vector<1xf32>
      %36 = vector.multi_reduction <add>, %35, %cst_21 [1, 2] : vector<1x16x1xf32> to vector<1xf32>
      %37 = vector.shape_cast %36 : vector<1xf32> to vector<1x1x1xf32>
      %38 = vector.extract %37[0, 0, 0] : f32 from vector<1x1x1xf32>
      %cst_22 = arith.constant 0.333333343 : f32
      %39 = vector.broadcast %cst_22 : f32 to vector<16x128xf32>
      %40 = arith.mulf %16, %39 : vector<16x128xf32>
      %cst_23 = arith.constant 0.333333343 : f32
      %41 = vector.broadcast %cst_23 : f32 to vector<16x1xf32>
      %42 = arith.mulf %18, %41 : vector<16x1xf32>
      %43 = vector.broadcast %42 : vector<16x1xf32> to vector<16x128xf32>
      %44 = arith.subf %40, %43 : vector<16x128xf32>
      %45 = math.exp %44 : vector<16x128xf32>
      %cst_24 = arith.constant dense<0.000000e+00> : vector<16xf32>
      %46 = vector.multi_reduction <add>, %45, %cst_24 [1] : vector<16x128xf32> to vector<16xf32>
      %47 = vector.shape_cast %46 : vector<16xf32> to vector<16x1xf32>
      %48 = math.log %47 : vector<16x1xf32>
      %49 = arith.addf %42, %48 : vector<16x1xf32>
      %50 = vector.broadcast %49 : vector<16x1xf32> to vector<16x128xf32>
      %51 = arith.subf %40, %50 : vector<16x128xf32>
      %cst_25 = arith.constant 0.333333343 : f32
      %52 = vector.broadcast %cst_25 : f32 to vector<16x128xf32>
      %53 = arith.mulf %15, %52 : vector<16x128xf32>
      %cst_26 = arith.constant dense<0xFF800000> : vector<16xf32>
      %54 = vector.multi_reduction <maximumf>, %53, %cst_26 [1] : vector<16x128xf32> to vector<16xf32>
      %55 = vector.shape_cast %54 : vector<16xf32> to vector<16x1xf32>
      %56 = vector.broadcast %55 : vector<16x1xf32> to vector<16x128xf32>
      %57 = arith.subf %53, %56 : vector<16x128xf32>
      %58 = math.exp %57 : vector<16x128xf32>
      %cst_27 = arith.constant dense<0.000000e+00> : vector<16xf32>
      %59 = vector.multi_reduction <add>, %58, %cst_27 [1] : vector<16x128xf32> to vector<16xf32>
      %60 = vector.shape_cast %59 : vector<16xf32> to vector<16x1xf32>
      %61 = math.log %60 : vector<16x1xf32>
      %62 = arith.addf %55, %61 : vector<16x1xf32>
      %63 = vector.broadcast %62 : vector<16x1xf32> to vector<16x128xf32>
      %64 = arith.subf %53, %63 : vector<16x128xf32>
      %65 = math.exp %64 : vector<16x128xf32>
      %66 = arith.subf %64, %51 : vector<16x128xf32>
      %67 = arith.mulf %65, %66 : vector<16x128xf32>
      %68 = vector.shape_cast %67 : vector<16x128xf32> to vector<1x16x128xf32>
      %cst_28 = arith.constant dense<0.000000e+00> : vector<1xf32>
      %69 = vector.multi_reduction <add>, %68, %cst_28 [1, 2] : vector<1x16x128xf32> to vector<1xf32>
      %70 = vector.shape_cast %69 : vector<1xf32> to vector<1x1x1xf32>
      %71 = vector.extract %70[0, 0, 0] : f32 from vector<1x1x1xf32>
      %cst_29 = arith.constant 3.200000e+01 : f32
      %72 = arith.divf %38, %cst_29 : f32
      %cst_30 = arith.constant 5.000000e-01 : f32
      %73 = arith.mulf %72, %cst_30 : f32
      %cst_31 = arith.constant 9.000000e+00 : f32
      %74 = arith.mulf %71, %cst_31 : f32
      %cst_32 = arith.constant 4.096000e+03 : f32
      %75 = arith.divf %74, %cst_32 : f32
      %cst_33 = arith.constant 5.000000e-01 : f32
      %76 = arith.mulf %75, %cst_33 : f32
      %77 = arith.addf %73, %76 : f32
      %78 = vector.broadcast %77 : f32 to vector<1x8x128xf32>
      %c0_34 = arith.constant 0 : index
      %c0_35 = arith.constant 0 : index
      %c0_36 = arith.constant 0 : index
      %79 = vector.load %arg7[%c0_34, %c0_35, %c0_36] : memref<1x8x128xf32, #tpu.memory_space<vmem>>, vector<1x8x128xf32>
      tpu.vector_store %arg7[%c0_34, %c0_35, %c0_36], %78 {strides = array<i32>} : memref<1x8x128xf32, #tpu.memory_space<vmem>>, vector<1x8x128xf32>,
    } else {
    }
    return
  }
  func.func @transform_0(%arg0: i32, %arg1: i32) -> (i32, i32) {
    %c0_i32 = arith.constant 0 : i32
    return %arg0, %arg1 : i32, i32
  }
  func.func @transform_1(%arg0: i32, %arg1: i32) -> (i32, i32) {
    %c0_i32 = arith.constant 0 : i32
    %c0_i32_0 = arith.constant 0 : i32
    return %arg1, %c0_i32 : i32, i32
  }
  func.func @transform_2(%arg0: i32, %arg1: i32) -> (i32, i32) {
    %c0_i32 = arith.constant 0 : i32
    %c0_i32_0 = arith.constant 0 : i32
    %c0_i32_1 = arith.constant 0 : i32
    return %c0_i32, %c0_i32_0 : i32, i32
  }
  func.func @transform_3(%arg0: i32, %arg1: i32) -> (i32, i32) {
    %c0_i32 = arith.constant 0 : i32
    %c0_i32_0 = arith.constant 0 : i32
    return %arg0, %c0_i32 : i32, i32
  }
  func.func @transform_4(%arg0: i32, %arg1: i32) -> (i32, i32) {
    %c0_i32 = arith.constant 0 : i32
    %c0_i32_0 = arith.constant 0 : i32
    return %arg0, %c0_i32 : i32, i32
  }
  func.func @transform_5(%arg0: i32, %arg1: i32) -> (i32, i32, i32) {
    %c0_i32 = arith.constant 0 : i32
    %c0_i32_0 = arith.constant 0 : i32
    %c0_i32_1 = arith.constant 0 : i32
    return %arg0, %c0_i32, %c0_i32_0 : i32, i32, i32
  }
}

</mosaic_0001>

<llo_original>
// kernel: tpu_custom_call.1
$region0: #{tpu_custom_call.1}
  #allocation0 [shape = 'u32[]', space=smem, size = 0x4, offset = 0x4, fixed_abs, tag = 'smem constant byte address 0x4 - core index']
  #allocation1 [shape = 'u32[144,128]{1,0:T(1,128)}', space=vmem, size = 0x12000, scoped, tag = 'internal scratch']
  #allocation2 [shape = 'f32[16,128]{1,0:T(8,128)}', space=vmem, size = 0x2000, scoped, tag = 'scratch operand']
  %s0 = inlined_call_operand.hbm [shape: bf16[32,1024], index: 0, kind: input, shape index: {}]
  %s1 = inlined_call_operand.hbm [shape: bf16[1024,128], index: 1, kind: input, shape index: {}]
  %s2 = inlined_call_operand.vmem [shape: f32[1,128], index: 2, kind: input, shape index: {}]
  %s3 = inlined_call_operand.vmem [shape: f32[32,128], index: 3, kind: input, shape index: {}]
  %s4 = inlined_call_operand.vmem [shape: s32[32,1], index: 4, kind: input, shape index: {}]
  %s5 = inlined_call_operand.hbm [shape: f32[2,8,128], index: 5, kind: output, shape index: {}]
  %s6 = sld [smem:[#allocation0]]
  $region69: #{tpu_custom_call.1} parent=0
    _
  %s8 = ssub.s32 1, %s6
  %s9 = scalar_select 0, %s8, %s6
  $region1: #{tpu_custom_call.1} parent=0
    #allocation3 [shape = 'u8[16384]{0}', space=vmem, size = 0x4000, scoped, tag = 'input window, operand 0']
    #allocation4 [shape = 's32[2]{0}', space=sflag, size = 0x8, scoped, tag = 'scoped memory for tpu_custom_call.1']
    #allocation5 [shape = 's32[2]{0}', space=sflag, size = 0x8, scoped, tag = 'scoped memory for tpu_custom_call.1']
    #allocation6 [shape = 'u8[131072]{0}', space=vmem, size = 0x20000, scoped, tag = 'input window, operand 1']
    #allocation7 [shape = 's32[2]{0}', space=sflag, size = 0x8, scoped, tag = 'scoped memory for tpu_custom_call.1']
    #allocation8 [shape = 'u8[8192]{0}', space=vmem, size = 0x2000, scoped, tag = 'output window, operand 0']
    %10 = vsyncpa [#allocation4], 0
    %s11 = scalar_lea.sflag [#allocation4], 1
    %12 = vsyncpa %s11, 0
    %13 = vsyncpa [#allocation7], 0
    %s14 = scalar_lea.sflag [#allocation7], 1
    %15 = vsyncpa %s14, 0
    %16 = vsyncpa [#allocation5], 0
    %s17 = scalar_lea.sflag [#allocation5], 1
    %18 = vsyncpa %s17, 0
    loop: start=0, step=1, limit=10
    $region2: #{tpu_custom_call.1} parent=1 // loop_pre_header
      _
    $region3: #{tpu_custom_call.1} parent=1 // loop_header
      %s20 = sphi 0, %s24
      %p21 = scmp.ge.s32.totalorder %s20, 10
      %s27 = sphi 0, %s39
      %s28 = sphi 0, %s35
      %s29 = sphi 0, %s27
      %s30 = sphi 0, %s28
      %s31 = sphi 0, %s29
      %s32 = sphi 0, %s30
      %s44 = sphi 0, %s46
      %s47 = sphi 0, %s44
      %s48 = sphi 0, %s47
      %s64 = sphi 0, %s48
      %s70 = sphi 0, %s72
      %s73 = sphi 0, %s70
      %s74 = sphi 0, %s73
      %s90 = sphi 0, %s74
      %s94 = sphi 0, %s94
      %s96 = sphi 0, %s94
      %s97 = sphi 0, %s96
      %s111 = sphi 0, %s97
      %s117 = sphi 0, %s119
      %s120 = sphi 0, %s117
      %s121 = sphi 0, %s120
      %s137 = sphi 0, %s121
      %s143 = sphi 0, %s145
      %s146 = sphi 0, %s143
      %s147 = sphi 0, %s146
      %s163 = sphi 0, %s147
      %s169 = sphi 0, %s171
      %s172 = sphi 0, %s169
      %s173 = sphi 0, %s172
      %s189 = sphi 0, %s173
    $region4: #{tpu_custom_call.1} parent=1 // loop_header_branch
      %23 = sbr.rel (%p21) target = $region8
    $region5: #{tpu_custom_call.1} parent=1 // loop_body
      %s25 = ssub.s32 %s20, 1
      %s26 = ssub.s32 %s20, 2
      %s33 = sadd.s32 1, %s28
      %p34 = scmp.ge.s32.totalorder %s33, 4
      %s35 = scalar_select %p34, 0, %s33
      %s36 = sadd.s32 1, %s27
      %s37 = scalar_select %p34, %s36, %s27
      %p38 = scmp.ge.s32.totalorder %s37, 2
      %s39 = scalar_select %p38, 0, %s37
      %s40 = ssub.s32 %s27, %s39
      %s41 = ssub.s32 %s28, %s35
      %s42 = sor.u32 %s40, %s41
      %p43 = scmp.eq.s32.totalorder %s42, 0
      %s45 = sadd.s32 %s44, 1
      %s46 = scalar_select %p43, %s44, %s45
      %p49 = pneg %p43
      %p50 = scmp.eq.s32.totalorder %s20, 7
      %p51 = por %p49, %p50
      %p52 = scmp.ne.s32.totalorder %s44, %s47
      %p53 = scmp.eq.s32.totalorder %s20, 0
      %p54 = por %p52, %p53
      %p55 = scmp.ne.s32.totalorder %s44, %s47
      %p56 = scmp.eq.s32.totalorder %s25, 7
      %p57 = por %p55, %p56
      %p58 = scmp.ne.s32.totalorder %s47, %s48
      %p59 = scmp.eq.s32.totalorder %s25, 0
      %p60 = por %p58, %p59
      %p61 = scmp.ne.s32.totalorder %s47, %s48
      %p62 = scmp.eq.s32.totalorder %s26, 7
      %p63 = por %p61, %p62
      %p65 = scmp.ne.s32.totalorder %s48, %s64
      %p66 = scmp.eq.s32.totalorder %s26, 0
      %p67 = por %p65, %p66
      %s68 = ssub.s32 %s28, %s35
      %p69 = scmp.eq.s32.totalorder %s68, 0
      %s71 = sadd.s32 %s70, 1
      %s72 = scalar_select %p69, %s70, %s71
      %p75 = pneg %p69
      %p76 = scmp.eq.s32.totalorder %s20, 7
      %p77 = por %p75, %p76
      %p78 = scmp.ne.s32.totalorder %s70, %s73
      %p79 = scmp.eq.s32.totalorder %s20, 0
      %p80 = por %p78, %p79
      %p81 = scmp.ne.s32.totalorder %s70, %s73
      %p82 = scmp.eq.s32.totalorder %s25, 7
      %p83 = por %p81, %p82
      %p84 = scmp.ne.s32.totalorder %s73, %s74
      %p85 = scmp.eq.s32.totalorder %s25, 0
      %p86 = por %p84, %p85
      %p87 = scmp.ne.s32.totalorder %s73, %s74
      %p88 = scmp.eq.s32.totalorder %s26, 7
      %p89 = por %p87, %p88
      %p91 = scmp.ne.s32.totalorder %s74, %s90
      %p92 = scmp.eq.s32.totalorder %s26, 0
      %p93 = por %p91, %p92
      %s95 = sadd.s32 %s94, 1
      %p98 = scmp.eq.s32.totalorder %s20, 7
      %p99 = scmp.ne.s32.totalorder %s94, %s96
      %p100 = scmp.eq.s32.totalorder %s20, 0
      %p101 = por %p99, %p100
      %p102 = scmp.ne.s32.totalorder %s94, %s96
      %p103 = scmp.eq.s32.totalorder %s25, 7
      %p104 = por %p102, %p103
      %p105 = scmp.ne.s32.totalorder %s96, %s97
      %p106 = scmp.eq.s32.totalorder %s25, 0
      %p107 = por %p105, %p106
      %p108 = scmp.ne.s32.totalorder %s96, %s97
      %p109 = scmp.eq.s32.totalorder %s26, 7
      %p110 = por %p108, %p109
      %p112 = scmp.ne.s32.totalorder %s97, %s111
      %p113 = scmp.eq.s32.totalorder %s26, 0
      %p114 = por %p112, %p113
      %s115 = ssub.s32 %s27, %s39
      %p116 = scmp.eq.s32.totalorder %s115, 0
      %s118 = sadd.s32 %s117, 1
      %s119 = scalar_select %p116, %s117, %s118
      %p122 = pneg %p116
      %p123 = scmp.eq.s32.totalorder %s20, 7
      %p124 = por %p122, %p123
      %p125 = scmp.ne.s32.totalorder %s117, %s120
      %p126 = scmp.eq.s32.totalorder %s20, 0
      %p127 = por %p125, %p126
      %p128 = scmp.ne.s32.totalorder %s117, %s120
      %p129 = scmp.eq.s32.totalorder %s25, 7
      %p130 = por %p128, %p129
      %p131 = scmp.ne.s32.totalorder %s120, %s121
      %p132 = scmp.eq.s32.totalorder %s25, 0
      %p133 = por %p131, %p132
      %p134 = scmp.ne.s32.totalorder %s120, %s121
      %p135 = scmp.eq.s32.totalorder %s26, 7
      %p136 = por %p134, %p135
      %p138 = scmp.ne.s32.totalorder %s121, %s137
      %p139 = scmp.eq.s32.totalorder %s26, 0
      %p140 = por %p138, %p139
      %s141 = ssub.s32 %s27, %s39
      %p142 = scmp.eq.s32.totalorder %s141, 0
      %s144 = sadd.s32 %s143, 1
      %s145 = scalar_select %p142, %s143, %s144
      %p148 = pneg %p142
      %p149 = scmp.eq.s32.totalorder %s20, 7
      %p150 = por %p148, %p149
      %p151 = scmp.ne.s32.totalorder %s143, %s146
      %p152 = scmp.eq.s32.totalorder %s20, 0
      %p153 = por %p151, %p152
      %p154 = scmp.ne.s32.totalorder %s143, %s146
      %p155 = scmp.eq.s32.totalorder %s25, 7
      %p156 = por %p154, %p155
      %p157 = scmp.ne.s32.totalorder %s146, %s147
      %p158 = scmp.eq.s32.totalorder %s25, 0
      %p159 = por %p157, %p158
      %p160 = scmp.ne.s32.totalorder %s146, %s147
      %p161 = scmp.eq.s32.totalorder %s26, 7
      %p162 = por %p160, %p161
      %p164 = scmp.ne.s32.totalorder %s147, %s163
      %p165 = scmp.eq.s32.totalorder %s26, 0
      %p166 = por %p164, %p165
      %s167 = ssub.s32 %s27, %s39
      %p168 = scmp.eq.s32.totalorder %s167, 0
      %s170 = sadd.s32 %s169, 1
      %s171 = scalar_select %p168, %s169, %s170
      %p174 = pneg %p168
      %p175 = scmp.eq.s32.totalorder %s20, 7
      %p176 = por %p174, %p175
      %p177 = scmp.ne.s32.totalorder %s169, %s172
      %p178 = scmp.eq.s32.totalorder %s20, 0
      %p179 = por %p177, %p178
      %p180 = scmp.ne.s32.totalorder %s169, %s172
      %p181 = scmp.eq.s32.totalorder %s25, 7
      %p182 = por %p180, %p181
      %p183 = scmp.ne.s32.totalorder %s172, %s173
      %p184 = scmp.eq.s32.totalorder %s25, 0
      %p185 = por %p183, %p184
      %p186 = scmp.ne.s32.totalorder %s172, %s173
      %p187 = scmp.eq.s32.totalorder %s26, 7
      %p188 = por %p186, %p187
      %p190 = scmp.ne.s32.totalorder %s173, %s189
      %p191 = scmp.eq.s32.totalorder %s26, 0
      %p192 = por %p190, %p191
      %p193 = scmp.le.s32.totalorder 1, %s20
      %p194 = scmp.lt.s32.totalorder %s20, 9
      %p195 = pnand %p193, %p194
      %p196 = pneg %p195
      // Predicated region
      $region9: #{tpu_custom_call.1} parent=5 // pred_check
        _
      $region10: #{tpu_custom_call.1} parent=5 // pred_check_branch
        %198 = sbr.rel (%p195) target = $region12
      $region11: #{tpu_custom_call.1} parent=5 // pred_region
        %s199 = ssub.s32 %s20, 1
        // Predicated region
        $region13: #{tpu_custom_call.1} parent=11 // pred_check
          %p200 = pneg %p107
        $region14: #{tpu_custom_call.1} parent=11 // pred_check_branch
          %202 = sbr.rel (%p200) target = $region16
        $region15: #{tpu_custom_call.1} parent=11 // pred_region
          _
        $region16: #{tpu_custom_call.1} parent=11 // pred_fallthru
          _
      $region12: #{tpu_custom_call.1} parent=5 // pred_fallthru
        _
      %p203 = scmp.lt.s32.totalorder %s20, 8
      // Predicated region
      $region17: #{tpu_custom_call.1} parent=5 // pred_check
        %p204 = pneg %p203
      $region18: #{tpu_custom_call.1} parent=5 // pred_check_branch
        %206 = sbr.rel (%p204) target = $region20
      $region19: #{tpu_custom_call.1} parent=5 // pred_region
        // Predicated region
        $region21: #{tpu_custom_call.1} parent=19 // pred_check
          %p207 = pneg %p54
        $region22: #{tpu_custom_call.1} parent=19 // pred_check_branch
          %209 = sbr.rel (%p207) target = $region24
        $region23: #{tpu_custom_call.1} parent=19 // pred_region
          %s210 = sand.u32 %s44, 1
          %s211 = scalar_lea.sflag [#allocation4], %s210
          %s212 = sand.u32 %s44, 1
          %s213 = smul.addr %s212, 16
          %s214 = scalar_lea.vmem [#allocation3], %s213
          %s215 = smul.u32 2, %s27
          %s216 = smul.u32 2, %s28
          %s218 = ssub.s32 256, 256
          %219 = vsyncadd %s211, %s218
          %s220 = smul.addr %s215, 8
          %s221 = sadd.s32 %s216, %s220
          %s222 = smul.addr %s221, 64
          %s223 = scalar_lea.hbm %s0, %s222
          %s224 = sshll.u32 %s214, 4
          %s225 = int_to_ptr.vmem [resolvable:$true] %s224
          %230 = dma.hbm_to_vmem [thread:$0]  %s223, 256, %s225, %s211, 512, 128, 8
        $region24: #{tpu_custom_call.1} parent=19 // pred_fallthru
          _
        // Predicated region
        $region25: #{tpu_custom_call.1} parent=19 // pred_check
          %p231 = pneg %p80
        $region26: #{tpu_custom_call.1} parent=19 // pred_check_branch
          %233 = sbr.rel (%p231) target = $region28
        $region27: #{tpu_custom_call.1} parent=19 // pred_region
          %s234 = sand.u32 %s70, 1
          %s235 = scalar_lea.sflag [#allocation7], %s234
          %s236 = sand.u32 %s70, 1
          %s237 = smul.addr %s236, 128
          %s238 = scalar_lea.vmem [#allocation6], %s237
          %s239 = smul.u32 32, %s28
          %s241 = ssub.s32 2048, 2048
          %242 = vsyncadd %s235, %s241
          %s243 = smul.addr %s239, 64
          %s244 = scalar_lea.hbm %s1, %s243
          %s245 = sshll.u32 %s238, 4
          %s246 = int_to_ptr.vmem [resolvable:$true] %s245
          %251 = dma.hbm_to_vmem [thread:$0]  %s244, 2048, %s246, %s235, 64, 64, 4
        $region28: #{tpu_custom_call.1} parent=19 // pred_fallthru
          _
        // Predicated region
        $region29: #{tpu_custom_call.1} parent=19 // pred_check
          %p252 = pneg %p127
        $region30: #{tpu_custom_call.1} parent=19 // pred_check_branch
          %254 = sbr.rel (%p252) target = $region32
        $region31: #{tpu_custom_call.1} parent=19 // pred_region
          %s255 = smul.u32 2, %s27
          %p256 = scmp.lt.s32.totalorder %s255, 3
          %s257 = scalar_select %p256, %s255, 3
          %s258 = smul.addr %s257, 8
          %s259 = scalar_lea.vmem %s3, %s258
          %s260 = smul.u32 2, %s27
        $region32: #{tpu_custom_call.1} parent=19 // pred_fallthru
          _
        // Predicated region
        $region33: #{tpu_custom_call.1} parent=19 // pred_check
          %p261 = pneg %p153
        $region34: #{tpu_custom_call.1} parent=19 // pred_check_branch
          %263 = sbr.rel (%p261) target = $region36
        $region35: #{tpu_custom_call.1} parent=19 // pred_region
          %s264 = smul.u32 2, %s27
          %p265 = scmp.lt.s32.totalorder %s264, 3
          %s266 = scalar_select %p265, %s264, 3
          %s267 = smul.addr %s266, 8
          %s268 = scalar_lea.vmem %s4, %s267
          %s269 = smul.u32 2, %s27
        $region36: #{tpu_custom_call.1} parent=19 // pred_fallthru
          _
      $region20: #{tpu_custom_call.1} parent=5 // pred_fallthru
        _
      %p270 = scmp.le.s32.totalorder 1, %s20
      %p271 = scmp.lt.s32.totalorder %s20, 9
      %p272 = pnand %p270, %p271
      %p273 = pneg %p272
      // Predicated region
      $region37: #{tpu_custom_call.1} parent=5 // pred_check
        _
      $region38: #{tpu_custom_call.1} parent=5 // pred_check_branch
        %275 = sbr.rel (%p272) target = $region40
      $region39: #{tpu_custom_call.1} parent=5 // pred_region
        %s276 = ssub.s32 %s20, 1
        %s277 = sand.u32 %s47, 1
        %s278 = scalar_lea.sflag [#allocation4], %s277
        %s279 = sand.u32 %s47, 1
        %s280 = smul.addr %s279, 16
        %s281 = scalar_lea.vmem [#allocation3], %s280
        // Predicated region
        $region41: #{tpu_custom_call.1} parent=39 // pred_check
          %p282 = pneg %p60
        $region42: #{tpu_custom_call.1} parent=39 // pred_check_branch
          %284 = sbr.rel (%p282) target = $region44
        $region43: #{tpu_custom_call.1} parent=39 // pred_region
          %285 = dma.done %s278, 256
        $region44: #{tpu_custom_call.1} parent=39 // pred_fallthru
          _
        %s286 = sand.u32 %s73, 1
        %s287 = scalar_lea.sflag [#allocation7], %s286
        %s288 = sand.u32 %s73, 1
        %s289 = smul.addr %s288, 128
        %s290 = scalar_lea.vmem [#allocation6], %s289
        // Predicated region
        $region45: #{tpu_custom_call.1} parent=39 // pred_check
          %p291 = pneg %p86
        $region46: #{tpu_custom_call.1} parent=39 // pred_check_branch
          %293 = sbr.rel (%p291) target = $region48
        $region47: #{tpu_custom_call.1} parent=39 // pred_region
          %294 = dma.done %s287, 2048
        $region48: #{tpu_custom_call.1} parent=39 // pred_fallthru
          _
        %s295 = sand.u32 %s47, 1
        %s296 = scalar_lea.sflag [#allocation4], %s295
        %s297 = sand.u32 %s47, 1
        %s298 = smul.addr %s297, 16
        %s299 = scalar_lea.vmem [#allocation3], %s298
        %p300 = pneg %p60
        %p301 = pneg %p57
        %s302 = sand.u32 %s73, 1
        %s303 = scalar_lea.sflag [#allocation7], %s302
        %s304 = sand.u32 %s73, 1
        %s305 = smul.addr %s304, 128
        %s306 = scalar_lea.vmem [#allocation6], %s305
        %p307 = pneg %p86
        %p308 = pneg %p83
        %p309 = pneg %p107
        %p310 = pneg %p104
        %s311 = smul.u32 2, %s29
        %p312 = scmp.lt.s32.totalorder %s311, 3
        %s313 = scalar_select %p312, %s311, 3
        %s314 = smul.addr %s313, 8
        %s315 = scalar_lea.vmem %s3, %s314
        %p316 = pneg %p133
        %p317 = pneg %p130
        %s318 = smul.u32 2, %s29
        %p319 = scmp.lt.s32.totalorder %s318, 3
        %s320 = scalar_select %p319, %s318, 3
        %s321 = smul.addr %s320, 8
        %s322 = scalar_lea.vmem %s4, %s321
        %p323 = pneg %p159
        %p324 = pneg %p156
        %p325 = pneg %p185
        %p326 = pneg %p182
        %s327 = sand.u32 %s172, 1
        %s328 = scalar_lea.sflag [#allocation5], %s327
        %s329 = sand.u32 %s172, 1
        %s330 = smul.addr %s329, 8
        %s331 = scalar_lea.vmem [#allocation8], %s330
        %s332 = smul.u32 2, %s29
        %s333 = smul.u32 2, %s30
        %s334 = smul.u32 32, %s30
        %s335 = smul.u32 2, %s29
        %p336 = scmp.lt.s32.totalorder %s335, 3
        %s337 = scalar_select %p336, %s335, 3
        %s338 = smul.addr %s337, 8
        %s339 = scalar_lea.vmem %s3, %s338
        %s340 = smul.u32 2, %s29
        %s341 = smul.u32 2, %s29
        %p342 = scmp.lt.s32.totalorder %s341, 3
        %s343 = scalar_select %p342, %s341, 3
        %s344 = smul.addr %s343, 8
        %s345 = scalar_lea.vmem %s4, %s344
        %s346 = smul.u32 2, %s29
        %p348 = scmp.eq.s32.totalorder %s30, 0
        // Predicated region
        $region49: #{tpu_custom_call.1} parent=39 // pred_check
          %p349 = pneg %p348
        $region50: #{tpu_custom_call.1} parent=39 // pred_check_branch
          %351 = sbr.rel (%p349) target = $region52
        $region51: #{tpu_custom_call.1} parent=39 // pred_region
          %352 = vst [vmem:[#allocation2] sm:$0xff] 0.0
          %353 = vst [vmem:[#allocation2 + $0x8] sm:$0xff] 0.0
        $region52: #{tpu_custom_call.1} parent=39 // pred_fallthru
          _
        %v354 = vld [vmem:[#allocation2] sm:$0xff]
        %v355 = vld [vmem:[#allocation2 + $0x8] sm:$0xff]
        %v356 = vld [vmem:[%s281] sm:$0xff]
        %v357 = vld [vmem:[%s281 + $0x8] sm:$0xff]
        %v358 = vld [vmem:[%s290] sm:$0xf]
        %v359 = vld [vmem:[%s290 + $0x4] sm:$0xf]
        %v360 = vld [vmem:[%s290 + $0x8] sm:$0xf]
        %v361 = vld [vmem:[%s290 + $0xc] sm:$0xf]
        %v362 = vld [vmem:[%s290 + $0x10] sm:$0xf]
        %v363 = vld [vmem:[%s290 + $0x14] sm:$0xf]
        %v364 = vld [vmem:[%s290 + $0x18] sm:$0xf]
        %v365 = vld [vmem:[%s290 + $0x1c] sm:$0xf]
        %v366 = vld [vmem:[%s290 + $0x20] sm:$0xf]
        %v367 = vld [vmem:[%s290 + $0x24] sm:$0xf]
        %v368 = vld [vmem:[%s290 + $0x28] sm:$0xf]
        %v369 = vld [vmem:[%s290 + $0x2c] sm:$0xf]
        %v370 = vld [vmem:[%s290 + $0x30] sm:$0xf]
        %v371 = vld [vmem:[%s290 + $0x34] sm:$0xf]
        %v372 = vld [vmem:[%s290 + $0x38] sm:$0xf]
        %v373 = vld [vmem:[%s290 + $0x3c] sm:$0xf]
        %v374 = vld [vmem:[%s290 + $0x40] sm:$0xf]
        %v375 = vld [vmem:[%s290 + $0x44] sm:$0xf]
        %v376 = vld [vmem:[%s290 + $0x48] sm:$0xf]
        %v377 = vld [vmem:[%s290 + $0x4c] sm:$0xf]
        %v378 = vld [vmem:[%s290 + $0x50] sm:$0xf]
        %v379 = vld [vmem:[%s290 + $0x54] sm:$0xf]
        %v380 = vld [vmem:[%s290 + $0x58] sm:$0xf]
        %v381 = vld [vmem:[%s290 + $0x5c] sm:$0xf]
        %v382 = vld [vmem:[%s290 + $0x60] sm:$0xf]
        %v383 = vld [vmem:[%s290 + $0x64] sm:$0xf]
        %v384 = vld [vmem:[%s290 + $0x68] sm:$0xf]
        %v385 = vld [vmem:[%s290 + $0x6c] sm:$0xf]
        %v386 = vld [vmem:[%s290 + $0x70] sm:$0xf]
        %v387 = vld [vmem:[%s290 + $0x74] sm:$0xf]
        %v388 = vld [vmem:[%s290 + $0x78] sm:$0xf]
        %v389 = vld [vmem:[%s290 + $0x7c] sm:$0xf]
        %v392 = vunpack.c.l.b16 %v356
        %v393 = vunpack.c.h.b16 %v356
        %v394 = vunpack.c.l.b16 %v357
        %v395 = vunpack.c.h.b16 %v357
        %v396 = vpack.c.b16 %v394, %v392
        %v397 = vpack.c.b16 %v395, %v393
        %v432 = vunpack.c.l.b16 %v358
        %v433 = vunpack.c.l.b16 %v359
        %v434 = vunpack.c.l.b16 %v360
        %v435 = vunpack.c.l.b16 %v361
        %v436 = vunpack.c.l.b16 %v362
        %v437 = vunpack.c.l.b16 %v363
        %v438 = vunpack.c.l.b16 %v364
        %v439 = vunpack.c.l.b16 %v365
        %v440 = vunpack.c.l.b16 %v366
        %v441 = vunpack.c.l.b16 %v367
        %v442 = vunpack.c.l.b16 %v368
        %v443 = vunpack.c.l.b16 %v369
        %v444 = vunpack.c.l.b16 %v370
        %v445 = vunpack.c.l.b16 %v371
        %v446 = vunpack.c.l.b16 %v372
        %v447 = vunpack.c.l.b16 %v373
        %v448 = vunpack.c.l.b16 %v374
        %v449 = vunpack.c.l.b16 %v375
        %v450 = vunpack.c.l.b16 %v376
        %v451 = vunpack.c.l.b16 %v377
        %v452 = vunpack.c.l.b16 %v378
        %v453 = vunpack.c.l.b16 %v379
        %v454 = vunpack.c.l.b16 %v380
        %v455 = vunpack.c.l.b16 %v381
        %v456 = vunpack.c.l.b16 %v382
        %v457 = vunpack.c.l.b16 %v383
        %v458 = vunpack.c.l.b16 %v384
        %v459 = vunpack.c.l.b16 %v385
        %v460 = vunpack.c.l.b16 %v386
        %v461 = vunpack.c.l.b16 %v387
        %v462 = vunpack.c.l.b16 %v388
        %v463 = vunpack.c.l.b16 %v389
        %v464 = vpack.c.b16 %v433, %v432
        %v465 = vpack.c.b16 %v435, %v434
        %v466 = vpack.c.b16 %v437, %v436
        %v467 = vpack.c.b16 %v439, %v438
        %v468 = vpack.c.b16 %v441, %v440
        %v469 = vpack.c.b16 %v443, %v442
        %v470 = vpack.c.b16 %v445, %v444
        %v471 = vpack.c.b16 %v447, %v446
        %v472 = vpack.c.b16 %v449, %v448
        %v473 = vpack.c.b16 %v451, %v450
        %v474 = vpack.c.b16 %v453, %v452
        %v475 = vpack.c.b16 %v455, %v454
        %v476 = vpack.c.b16 %v457, %v456
        %v477 = vpack.c.b16 %v459, %v458
        %v478 = vpack.c.b16 %v461, %v460
        %v479 = vpack.c.b16 %v463, %v462
        %496 = vmatprep.subr.bf16.mxu0 0
        %497 = vmatpush1.bf16.msra.mxu0 %v464
        %498 = vmatprep.subr.bf16.mxu0 0
        %499 = vmatpush1.bf16.msra.mxu0 %v465
        %500 = vmatprep.subr.bf16.mxu0 0
        %501 = vmatpush1.bf16.msra.mxu0 %v466
        %502 = vmatprep.subr.bf16.mxu0 0
        %503 = vmatpush1.bf16.msra.mxu0 %v467
        %504 = vmatprep.subr.bf16.mxu0 0
        %505 = vmatpush1.bf16.msra.mxu0 %v468
        %506 = vmatprep.subr.bf16.mxu0 0
        %507 = vmatpush1.bf16.msra.mxu0 %v469
        %508 = vmatprep.subr.bf16.mxu0 0
        %509 = vmatpush1.bf16.msra.mxu0 %v470
        %510 = vmatprep.subr.bf16.mxu0 0
        %511 = vmatpush1.bf16.msra.mxu0 %v471
        %512 = vmatprep.subr.bf16.mxu0 0
        %513 = vmatpush1.bf16.msra.mxu0 %v472
        %514 = vmatprep.subr.bf16.mxu0 0
        %515 = vmatpush1.bf16.msra.mxu0 %v473
        %516 = vmatprep.subr.bf16.mxu0 0
        %517 = vmatpush1.bf16.msra.mxu0 %v474
        %518 = vmatprep.subr.bf16.mxu0 0
        %519 = vmatpush1.bf16.msra.mxu0 %v475
        %520 = vmatprep.subr.bf16.mxu0 0
        %521 = vmatpush1.bf16.msra.mxu0 %v476
        %522 = vmatprep.subr.bf16.mxu0 0
        %523 = vmatpush1.bf16.msra.mxu0 %v477
        %524 = vmatprep.subr.bf16.mxu0 0
        %525 = vmatpush1.bf16.msra.mxu0 %v478
        %526 = vmatprep.subr.bf16.mxu0 0
        %527 = vmatpush1.bf16.msra.mxu0 %v479
        %528 = vmatprep.mubr.bf16.mxu0 %v397
        %529 = vmatmul.mubr.bf16.gmra.mrb[0].mxu0 %v396
        %v530 = vpop.f32.mrb[0].mxu0
        %v531 = vadd.f32 0.0, %v530
        %v532 = vpop.f32.mrb[0].mxu0
        %v533 = vpop.f32.mrb[0].mxu0
        %v534 = vadd.f32 0.0, %v533
        %v535 = vpop.f32.mrb[0].mxu0
        %536 = vdwg.mxu0
        %v537 = vadd.f32 %v354, %v531
        %v538 = vadd.f32 %v355, %v534
        %539 = vst [vmem:[#allocation2] sm:$0xff] %v537
        %540 = vst [vmem:[#allocation2 + $0x8] sm:$0xff] %v538
        %p541 = scmp.eq.s32.totalorder %s30, 3
        // Predicated region
        $region53: #{tpu_custom_call.1} parent=39 // pred_check
          %p542 = pneg %p541
        $region54: #{tpu_custom_call.1} parent=39 // pred_check_branch
          %544 = sbr.rel (%p542) target = $region56
        $region55: #{tpu_custom_call.1} parent=39 // pred_region
          %v545 = vld [vmem:[#allocation2] sm:$0xff]
          %v546 = vld [vmem:[#allocation2 + $0x8] sm:$0xff]
          %v547 = vld [vmem:[%s2] sm:$0x1]
          %v549 = vlaneseq
          %v550 = vshrl.u32 %v549, 7
          %v551 = vsub.s32 0, %v550
          %v552 = vrot.slane %v547, %v551
          %v554 = vadd.f32 %v545, %v552
          %v555 = vadd.f32 %v546, %v552
          %v556 = vld [vmem:[%s339] sm:$0xff]
          %v557 = vld [vmem:[%s339 + $0x8] sm:$0xff]
          %558 = vmax.xlane.f32.xlu0 %v556
          %v559 = vpop.xlane.xlu0 %558
          %560 = vmax.xlane.f32.xlu0 %v557
          %v561 = vpop.xlane.xlu0 %560
          %v562 = vsub.f32 %v556, %v559
          %v563 = vsub.f32 %v557, %v561
          %v564 = vmul.f32 %v562, 1.442695
          %v565 = vpow.pop %v564
          %v566 = vmul.f32 %v563, 1.442695
          %v567 = vpow.pop %v566
          %568 = vadd.xlane.f32.xlu0 %v565
          %v569 = vpop.xlane.xlu0 %568
          %570 = vadd.xlane.f32.xlu0 %v567
          %v571 = vpop.xlane.xlu0 %570
          %v572 = vlog2.pop %v569
          %v573 = vmul.f32 %v572, 0.6931472
          %v574 = vlog2.pop %v571
          %v575 = vmul.f32 %v574, 0.6931472
          %v576 = vadd.f32 %v559, %v573
          %v577 = vadd.f32 %v561, %v575
          %v578 = vlaneseq
          %v579 = vand.u32 %v578, 127
          %v580 = vld [vmem:[%s345] sm:$0xff]
          %v581 = vld [vmem:[%s345 + $0x8] sm:$0xff]
          %582 = vset.pattern.permute.xlu0 0
          %583 = vperm.xlu0 %582, %v580
          %v584 = vpop.permute.xlu0 %583
          %585 = vset.pattern.permute.xlu0 0
          %586 = vperm.xlu0 %585, %v581
          %v587 = vpop.permute.xlu0 %586
          %vm588 = vcmp.eq.s32.totalorder %v579, %v584
          %vm589 = vcmp.eq.s32.totalorder %v579, %v587
          %v590 = vsel %vm588, %v556, 0.0
          %v591 = vsel %vm589, %v557, 0.0
          %592 = vadd.xlane.f32.xlu0 %v590
          %v593 = vpop.xlane.xlu0 %592
          %594 = vadd.xlane.f32.xlu0 %v591
          %v595 = vpop.xlane.xlu0 %594
          %v596 = vsub.f32 %v576, %v593
          %v597 = vsub.f32 %v577, %v595
          %vm598 = vcmask 7168
          %v599 = vsel %vm598, %v596, 0.0
          %v600 = vsel %vm598, %v597, 0.0
          %v601 = vadd.f32 %v599, %v600
          %602 = vadd.xlane.f32.xlu0 %v601
          %v603 = vpop.xlane.xlu0 %602
          %v604 = vrot.slane %v603, 4
          %v605 = vadd.f32 %v603, %v604
          %v606 = vrot.slane %v605, 2
          %v607 = vadd.f32 %v605, %v606
          %v608 = vrot.slane %v607, 1
          %v609 = vadd.f32 %v607, %v608
          %s610 = vtos %v609
          %v611 = vmul.f32 %v556, 0.33333334
          %v612 = vmul.f32 %v557, 0.33333334
          %v613 = vmul.f32 %v559, 0.33333334
          %v614 = vmul.f32 %v561, 0.33333334
          %v615 = vsub.f32 %v611, %v613
          %v616 = vsub.f32 %v612, %v614
          %v617 = vmul.f32 %v615, 1.442695
          %v618 = vpow.pop %v617
          %v619 = vmul.f32 %v616, 1.442695
          %v620 = vpow.pop %v619
          %621 = vadd.xlane.f32.xlu0 %v618
          %v622 = vpop.xlane.xlu0 %621
          %623 = vadd.xlane.f32.xlu0 %v620
          %v624 = vpop.xlane.xlu0 %623
          %v625 = vlog2.pop %v622
          %v626 = vmul.f32 %v625, 0.6931472
          %v627 = vlog2.pop %v624
          %v628 = vmul.f32 %v627, 0.6931472
          %v629 = vadd.f32 %v613, %v626
          %v630 = vadd.f32 %v614, %v628
          %v631 = vsub.f32 %v611, %v629
          %v632 = vsub.f32 %v612, %v630
          %v633 = vmul.f32 %v554, 0.33333334
          %v634 = vmul.f32 %v555, 0.33333334
          %635 = vmax.xlane.f32.xlu0 %v633
          %v636 = vpop.xlane.xlu0 %635
          %637 = vmax.xlane.f32.xlu0 %v634
          %v638 = vpop.xlane.xlu0 %637
          %v639 = vsub.f32 %v633, %v636
          %v640 = vsub.f32 %v634, %v638
          %v641 = vmul.f32 %v639, 1.442695
          %v642 = vpow.pop %v641
          %v643 = vmul.f32 %v640, 1.442695
          %v644 = vpow.pop %v643
          %645 = vadd.xlane.f32.xlu0 %v642
          %v646 = vpop.xlane.xlu0 %645
          %647 = vadd.xlane.f32.xlu0 %v644
          %v648 = vpop.xlane.xlu0 %647
          %v649 = vlog2.pop %v646
          %v650 = vmul.f32 %v649, 0.6931472
          %v651 = vlog2.pop %v648
          %v652 = vmul.f32 %v651, 0.6931472
          %v653 = vadd.f32 %v636, %v650
          %v654 = vadd.f32 %v638, %v652
          %v655 = vsub.f32 %v633, %v653
          %v656 = vsub.f32 %v634, %v654
          %v657 = vmul.f32 %v655, 1.442695
          %v658 = vpow.pop %v657
          %v659 = vmul.f32 %v656, 1.442695
          %v660 = vpow.pop %v659
          %v661 = vsub.f32 %v655, %v631
          %v662 = vsub.f32 %v656, %v632
          %v663 = vmul.f32 %v658, %v661
          %v664 = vmul.f32 %v660, %v662
          %v665 = vadd.f32 %v663, %v664
          %666 = vadd.xlane.f32.xlu0 %v665
          %v667 = vpop.xlane.xlu0 %666
          %v668 = vrot.slane %v667, 4
          %v669 = vadd.f32 %v667, %v668
          %v670 = vrot.slane %v669, 2
          %v671 = vadd.f32 %v669, %v670
          %v672 = vrot.slane %v671, 1
          %v673 = vadd.f32 %v671, %v672
          %s674 = vtos %v673
          %v675 = vrcp.pop 32.0
          %s676 = vtos %v675
          %s677 = smul.f32 %s610, %s676
          %s678 = smul.f32 %s677, 0.5
          %s679 = smul.f32 %s674, 9.0
          %v680 = vrcp.pop 4096.0
          %s681 = vtos %v680
          %s682 = smul.f32 %s679, %s681
          %s683 = smul.f32 %s682, 0.5
          %s684 = sadd.f32 %s678, %s683
          %v685 = vstv %s684
          %686 = vst [vmem:[%s331] sm:$0xff] %v685
        $region56: #{tpu_custom_call.1} parent=39 // pred_fallthru
          _
        %s687 = sand.u32 %s172, 1
        %s688 = scalar_lea.sflag [#allocation5], %s687
        %s689 = sand.u32 %s172, 1
        %s690 = smul.addr %s689, 8
        %s691 = scalar_lea.vmem [#allocation8], %s690
        // Predicated region
        $region57: #{tpu_custom_call.1} parent=39 // pred_check
          %p692 = pneg %p182
        $region58: #{tpu_custom_call.1} parent=39 // pred_check_branch
          %694 = sbr.rel (%p692) target = $region60
        $region59: #{tpu_custom_call.1} parent=39 // pred_region
          %s696 = ssub.s32 128, 128
          %697 = vsyncadd %s688, %s696
          %s698 = smul.addr %s29, 128
          %s699 = scalar_lea.hbm %s5, %s698
          %s701 = sshll.u32 %s691, 4
          %s702 = int_to_ptr.vmem [resolvable:$true] %s701
          %704 = dma.vmem_to_hbm [thread:$0]  %s702, 128, %s699, %s688
        $region60: #{tpu_custom_call.1} parent=39 // pred_fallthru
          _
      $region40: #{tpu_custom_call.1} parent=5 // pred_fallthru
        _
      %p705 = scmp.le.s32.totalorder 2, %s20
      // Predicated region
      $region61: #{tpu_custom_call.1} parent=5 // pred_check
        %p706 = pneg %p705
      $region62: #{tpu_custom_call.1} parent=5 // pred_check_branch
        %708 = sbr.rel (%p706) target = $region64
      $region63: #{tpu_custom_call.1} parent=5 // pred_region
        %s709 = ssub.s32 %s20, 2
        // Predicated region
        $region65: #{tpu_custom_call.1} parent=63 // pred_check
          %p710 = pneg %p188
        $region66: #{tpu_custom_call.1} parent=63 // pred_check_branch
          %712 = sbr.rel (%p710) target = $region68
        $region67: #{tpu_custom_call.1} parent=63 // pred_region
          %s713 = sand.u32 %s173, 1
          %s714 = scalar_lea.sflag [#allocation5], %s713
          %s715 = sand.u32 %s173, 1
          %s716 = smul.addr %s715, 8
          %s717 = scalar_lea.vmem [#allocation8], %s716
          %718 = dma.done %s714, 128
        $region68: #{tpu_custom_call.1} parent=63 // pred_fallthru
          _
      $region64: #{tpu_custom_call.1} parent=5 // pred_fallthru
        _
    $region6: #{tpu_custom_call.1} parent=1 // loop_footer
      %s24 = sadd.s32 1, %s20
    $region7: #{tpu_custom_call.1} parent=1 // loop_footer_branch
      %19 = sbr.rel target = $region3
    $region8: #{tpu_custom_call.1} parent=1 // loop_exit
      _
    %719 = vsyncpa [#allocation4], 1
    %s720 = scalar_lea.sflag [#allocation4], 1
    %721 = vsyncpa %s720, 1
    %722 = vsyncpa [#allocation7], 1
    %s723 = scalar_lea.sflag [#allocation7], 1
    %724 = vsyncpa %s723, 1
    %725 = vsyncpa [#allocation5], 1
    %s726 = scalar_lea.sflag [#allocation5], 1
    %727 = vsyncpa %s726, 1

</llo_original>
